<compile_context>
chip_gen: v7x
topology: tpu7x:2x2x1
jax: 0.10.0
libtpu: 0.0.40
codegen_flags: <defaults>
</compile_context>

<pallas_src>
import functools

import jax
import jax.numpy as jnp
from jax.experimental import pallas as pl
from jax.experimental.pallas import tpu as pltpu


# ----------------------------------- kernel ----------------------------------

def _conv_mm_kernel(p_ref, w_ref, b_ref, o_ref, *, apply_relu):
    """One (image, spatial-tile) block: matmul + bias (+ ReLU).

    p_ref : (1, KKC, HWt)   bf16  im2col patches (spatial on lanes)
    w_ref : (Cout, KKC)     bf16  conv weight with BN folded in
    b_ref : (Cout, 1)       f32   conv bias with BN folded in
    o_ref : (1, Cout, HWt)  f32   lane-dense output tile
    """
    y = jnp.dot(w_ref[...], p_ref[0],
                preferred_element_type=jnp.float32)        # (Cout, HWt) f32
    y = y + b_ref[...]                                      # lane-broadcast bias
    if apply_relu:
        y = jnp.maximum(y, 0.0)
    o_ref[0] = y


# ---------------------------------- wrapper -----------------------------------

def conv_forward(x_nchw, params, *, kernel_size=3, stride=1, relu=True,
                 bn=False, bn_eps=1e-5, hw_block=None):
    """Pallas implementation of Conv.forward (eval mode), NCHW in / NCHW out."""
    b, cin, h, w = x_nchw.shape
    weight = params['weight']                              # (Cout, Cin, K, K)
    bias = params['bias']
    if bias is None:
        bias = jnp.zeros((weight.shape[0],), jnp.float32)
    cout = weight.shape[0]
    k = kernel_size
    assert weight.shape == (cout, cin, k, k)
    assert stride == 1 and k % 2 == 1, \
        "only stride=1 with odd kernel sizes is implemented"
    assert cin == x_nchw.shape[1]

    # Fold eval-mode BatchNorm into the conv weight / bias (f32), then cast.
    if bn:
        s = params['bn_gamma'] * jax.lax.rsqrt(params['bn_var'] + bn_eps)
        weight = weight * s[:, None, None, None]
        bias = (bias - params['bn_mean']) * s + params['bn_beta']

    kkc = k * k * cin
    # (Cout, Cin, K, K) -> (Cout, K, K, Cin) -> (Cout, K*K*Cin); bf16 for MXU.
    w_mat = jnp.transpose(weight, (0, 2, 3, 1)).reshape(cout, kkc)
    w_mat = w_mat.astype(jnp.bfloat16)
    b_col = bias.reshape(cout, 1).astype(jnp.float32)

    # Cast activations to bf16 ONCE, then pad + im2col in the wrapper (XLA).
    # Patches land as (B, K*K*Cin, H*W): channels on sublanes, spatial on lanes.
    p = (k - 1) // 2
    x = x_nchw.astype(jnp.bfloat16)
    xpad = jnp.pad(x, ((0, 0), (0, 0), (p, p), (p, p)))
    taps = [xpad[:, :, dy:dy + h, dx:dx + w]
            for dy in range(k) for dx in range(k)]          # each (B,Cin,H,W)
    patches = jnp.stack(taps, axis=1).reshape(b, kkc, h * w)  # (B, KKC, H*W)

    hw = h * w
    if hw_block is None:
        hw_block = hw if hw <= 2048 else 2048               # bound VMEM on v7x
    assert hw % hw_block == 0 and (hw_block % 128 == 0 or hw_block == hw)
    n_hw = hw // hw_block

    kernel = functools.partial(_conv_mm_kernel, apply_relu=relu)
    out = pl.pallas_call(
        kernel,
        out_shape=jax.ShapeDtypeStruct((b, cout, hw), jnp.float32),
        grid=(b, n_hw),
        in_specs=[
            pl.BlockSpec((1, kkc, hw_block), lambda i, s: (i, 0, s)),
            pl.BlockSpec((cout, kkc), lambda i, s: (0, 0)),   # resident weight
            pl.BlockSpec((cout, 1), lambda i, s: (0, 0)),     # resident bias
        ],
        out_specs=pl.BlockSpec((1, cout, hw_block), lambda i, s: (i, 0, s)),
        compiler_params=pltpu.CompilerParams(
            dimension_semantics=("parallel", "parallel")),
    )(patches, w_mat, b_col)

    return out.reshape(b, cout, h, w)                       # reshape only, NCHW


# ---------------------------- reference & params -------------------------------

def conv_reference(x_nchw, params, *, kernel_size=3, relu=True, bn=False,
                   bn_eps=1e-5):
    """Pure-JAX f32 reference of the PyTorch module (eval mode)."""
    weight = params['weight']
    bias = params['bias']
    if bias is None:
        bias = jnp.zeros((weight.shape[0],), jnp.float32)
    p = (kernel_size - 1) // 2
    y = jax.lax.conv_general_dilated(
        x_nchw.astype(jnp.float32), weight,
        window_strides=(1, 1), padding=[(p, p), (p, p)],
        dimension_numbers=('NCHW', 'OIHW', 'NCHW'),
        precision=jax.lax.Precision.HIGHEST)
    y = y + bias[None, :, None, None]
    if bn:
        s = params['bn_gamma'] * jax.lax.rsqrt(params['bn_var'] + bn_eps)
        y = (y - params['bn_mean'][None, :, None, None]) * s[None, :, None, None] \
            + params['bn_beta'][None, :, None, None]
    if relu:
        y = jnp.maximum(y, 0.0)
    return y


def init_params(key, cin, cout, k=3):
    kw, kb, kg, kbe, km, kv = jax.random.split(key, 6)
    std = (2.0 / (cin * k * k)) ** 0.5
    return {
        'weight': std * jax.random.normal(kw, (cout, cin, k, k), jnp.float32),
        'bias': 0.1 * jax.random.normal(kb, (cout,), jnp.float32),
        'bn_gamma': 1.0 + 0.1 * jax.random.normal(kg, (cout,), jnp.float32),
        'bn_beta': 0.1 * jax.random.normal(kbe, (cout,), jnp.float32),
        'bn_mean': 0.1 * jax.random.normal(km, (cout,), jnp.float32),
        'bn_var': 0.5 + jax.random.uniform(kv, (cout,), jnp.float32),
    }


# ------------------------------------ main ------------------------------------

if __name__ == "__main__":
    key = jax.random.PRNGKey(0)
    k_x, k_p = jax.random.split(key, 2)
    B, Cin, H, W = 2, 4, 16, 16
    Cout, K = 8, 3

    x = jax.random.normal(k_x, (B, Cin, H, W), jnp.float32)
    params = init_params(k_p, Cin, Cout, K)

    # Module defaults: kernel_size=3, stride=1, bn=False, relu=True, bias=True.
    fwd_default = jax.jit(functools.partial(conv_forward, relu=True, bn=False))
    out = fwd_default(x, params)
    jax.block_until_ready(out)
    assert out.shape == (B, Cout, H, W), out.shape
    assert bool(jnp.all(jnp.isfinite(out)))
    ref = conv_reference(x, params, relu=True, bn=False)
    err = float(jnp.max(jnp.abs(out - ref)))
    assert err < 1e-1, f"default path max abs err {err}"

    # bn=True path (eval-mode BN folded into the matmul weight/bias).
    fwd_bn = jax.jit(functools.partial(conv_forward, relu=True, bn=True))
    out_bn = fwd_bn(x, params)
    jax.block_until_ready(out_bn)
    assert out_bn.shape == (B, Cout, H, W), out_bn.shape
    assert bool(jnp.all(jnp.isfinite(out_bn)))
    ref_bn = conv_reference(x, params, relu=True, bn=True)
    err_bn = float(jnp.max(jnp.abs(out_bn - ref_bn)))
    assert err_bn < 1e-1, f"bn path max abs err {err_bn}"

    print("KERNEL_OK")
</pallas_src>

<mosaic_0001>
module attributes {stable_mosaic.version = 11 : i64} {
  func.func @_conv_mm_kernel(%arg0: i32, %arg1: i32, %arg2: memref<1x36x256xbf16, #tpu.memory_space<vmem>>, %arg3: memref<8x36xbf16, #tpu.memory_space<vmem>>, %arg4: memref<8x1xf32, #tpu.memory_space<vmem>>, %arg5: memref<1x8x256xf32, #tpu.memory_space<vmem>>) attributes {dimension_semantics = [#tpu.dimension_semantics<parallel>, #tpu.dimension_semantics<parallel>], iteration_bounds = array<i64: 2, 1>, scalar_prefetch = 0 : i64, scratch_operands = 0 : i64, tpu.core_type = #tpu.core_type<tc>, window_params = [{transform_indices = @transform_0, window_bounds = array<i64: 1, 36, 256>}, {pipeline_mode = #tpu.pipeline_mode<synchronous>, transform_indices = @transform_1, window_bounds = array<i64: 8, 36>}, {pipeline_mode = #tpu.pipeline_mode<synchronous>, transform_indices = @transform_2, window_bounds = array<i64: 8, 1>}, {transform_indices = @transform_3, window_bounds = array<i64: 1, 8, 256>}]} {
    %c0 = arith.constant 0 : index
    %c0_0 = arith.constant 0 : index
    %0 = vector.load %arg3[%c0, %c0_0] : memref<8x36xbf16, #tpu.memory_space<vmem>>, vector<8x36xbf16>
    %c0_1 = arith.constant 0 : index
    %c0_2 = arith.constant 0 : index
    %c0_3 = arith.constant 0 : index
    %1 = vector.load %arg2[%c0_1, %c0_2, %c0_3] : memref<1x36x256xbf16, #tpu.memory_space<vmem>>, vector<1x36x256xbf16>
    %2 = vector.shape_cast %1 : vector<1x36x256xbf16> to vector<36x256xbf16>
    %cst = arith.constant dense<0.000000e+00> : vector<8x256xf32>
    %3 = tpu.matmul %0, %2, %cst {dimension_numbers = #tpu.dot_dimension_numbers<[1], [0], [0], [1], [0, 0, 1, 1], [], []>} : vector<8x36xbf16>, vector<36x256xbf16>, vector<8x256xf32> -> vector<8x256xf32>
    %c0_4 = arith.constant 0 : index
    %c0_5 = arith.constant 0 : index
    %4 = vector.load %arg4[%c0_4, %c0_5] : memref<8x1xf32, #tpu.memory_space<vmem>>, vector<8x1xf32>
    %5 = vector.broadcast %4 : vector<8x1xf32> to vector<8x256xf32>
    %6 = arith.addf %3, %5 : vector<8x256xf32>
    %cst_6 = arith.constant 0.000000e+00 : f32
    %7 = vector.broadcast %cst_6 : f32 to vector<8x256xf32>
    %8 = arith.maximumf %6, %7 : vector<8x256xf32>
    %c0_7 = arith.constant 0 : index
    %c0_8 = arith.constant 0 : index
    %c0_9 = arith.constant 0 : index
    %9 = vector.load %arg5[%c0_7, %c0_8, %c0_9] : memref<1x8x256xf32, #tpu.memory_space<vmem>>, vector<1x8x256xf32>
    %10 = vector.shape_cast %9 : vector<1x8x256xf32> to vector<8x256xf32>
    %11 = vector.shape_cast %8 : vector<8x256xf32> to vector<1x8x256xf32>
    tpu.vector_store %arg5[%c0_7, %c0_8, %c0_9], %11 {strides = array<i32>} : memref<1x8x256xf32, #tpu.memory_space<vmem>>, vector<1x8x256xf32>,
    return
  }
  func.func @transform_0(%arg0: i32, %arg1: i32) -> (i32, i32, i32) {
    %c0_i32 = arith.constant 0 : i32
    %c0_i32_0 = arith.constant 0 : i32
    return %arg0, %c0_i32, %arg1 : i32, i32, i32
  }
  func.func @transform_1(%arg0: i32, %arg1: i32) -> (i32, i32) {
    %c0_i32 = arith.constant 0 : i32
    %c0_i32_0 = arith.constant 0 : i32
    %c0_i32_1 = arith.constant 0 : i32
    return %c0_i32, %c0_i32_0 : i32, i32
  }
  func.func @transform_2(%arg0: i32, %arg1: i32) -> (i32, i32) {
    %c0_i32 = arith.constant 0 : i32
    %c0_i32_0 = arith.constant 0 : i32
    %c0_i32_1 = arith.constant 0 : i32
    return %c0_i32, %c0_i32_0 : i32, i32
  }
  func.func @transform_3(%arg0: i32, %arg1: i32) -> (i32, i32, i32) {
    %c0_i32 = arith.constant 0 : i32
    %c0_i32_0 = arith.constant 0 : i32
    return %arg0, %c0_i32, %arg1 : i32, i32, i32
  }
}

</mosaic_0001>

<llo_original>
// kernel: conv_forward.1
$region0: #{conv_forward.1}
  #allocation0 [shape = 'u32[]', space=smem, size = 0x4, offset = 0x4, fixed_abs, tag = 'smem constant byte address 0x4 - core index']
  #allocation1 [shape = 'u32[144,128]{1,0:T(1,128)}', space=vmem, size = 0x12000, scoped, tag = 'internal scratch']
  %s0 = inlined_call_operand.vmem [shape: bf16[2,36,256], index: 0, kind: input, shape index: {}]
  %s1 = inlined_call_operand.vmem [shape: bf16[8,36], index: 1, kind: input, shape index: {}]
  %s2 = inlined_call_operand.vmem [shape: f32[8,1], index: 2, kind: input, shape index: {}]
  %s3 = inlined_call_operand.vmem [shape: f32[2,8,256], index: 3, kind: output, shape index: {}]
  %s4 = sld [smem:[#allocation0]]
  $region45: #{conv_forward.1} parent=0
    _
  %s6 = ssub.s32 1, %s4
  %s7 = scalar_select 0, %s6, %s4
  loop: start=0, step=1, limit=4
  $region2: #{conv_forward.1} parent=0 // loop_pre_header
    _
  $region3: #{conv_forward.1} parent=0 // loop_header
    %s9 = sphi 0, %s13
    %p10 = scmp.ge.s32.totalorder %s9, 4
    %s16 = sphi 0, %s28
    %s17 = sphi 0, %s24
    %s18 = sphi 0, %s16
    %s19 = sphi 0, %s17
    %s20 = sphi 0, %s18
    %s21 = sphi 0, %s19
    %s33 = sphi 0, %s35
    %s36 = sphi 0, %s33
    %s37 = sphi 0, %s36
    %s53 = sphi 0, %s37
    %s57 = sphi 0, %s57
    %s59 = sphi 0, %s57
    %s60 = sphi 0, %s59
    %s74 = sphi 0, %s60
    %s78 = sphi 0, %s78
    %s80 = sphi 0, %s78
    %s81 = sphi 0, %s80
    %s95 = sphi 0, %s81
    %s103 = sphi 0, %s105
    %s106 = sphi 0, %s103
    %s107 = sphi 0, %s106
    %s123 = sphi 0, %s107
  $region4: #{conv_forward.1} parent=0 // loop_header_branch
    %12 = sbr.rel (%p10) target = $region8
  $region5: #{conv_forward.1} parent=0 // loop_body
    %s14 = ssub.s32 %s9, 1
    %s15 = ssub.s32 %s9, 2
    %s22 = sadd.s32 1, %s17
    %p23 = scmp.ge.s32.totalorder %s22, 1
    %s24 = scalar_select %p23, 0, %s22
    %s25 = sadd.s32 1, %s16
    %s26 = scalar_select %p23, %s25, %s16
    %p27 = scmp.ge.s32.totalorder %s26, 2
    %s28 = scalar_select %p27, 0, %s26
    %s29 = ssub.s32 %s16, %s28
    %s30 = ssub.s32 %s17, %s24
    %s31 = sor.u32 %s29, %s30
    %p32 = scmp.eq.s32.totalorder %s31, 0
    %s34 = sadd.s32 %s33, 1
    %s35 = scalar_select %p32, %s33, %s34
    %p38 = pneg %p32
    %p39 = scmp.eq.s32.totalorder %s9, 1
    %p40 = por %p38, %p39
    %p41 = scmp.ne.s32.totalorder %s33, %s36
    %p42 = scmp.eq.s32.totalorder %s9, 0
    %p43 = por %p41, %p42
    %p44 = scmp.ne.s32.totalorder %s33, %s36
    %p45 = scmp.eq.s32.totalorder %s14, 1
    %p46 = por %p44, %p45
    %p47 = scmp.ne.s32.totalorder %s36, %s37
    %p48 = scmp.eq.s32.totalorder %s14, 0
    %p49 = por %p47, %p48
    %p50 = scmp.ne.s32.totalorder %s36, %s37
    %p51 = scmp.eq.s32.totalorder %s15, 1
    %p52 = por %p50, %p51
    %p54 = scmp.ne.s32.totalorder %s37, %s53
    %p55 = scmp.eq.s32.totalorder %s15, 0
    %p56 = por %p54, %p55
    %s58 = sadd.s32 %s57, 1
    %p61 = scmp.eq.s32.totalorder %s9, 1
    %p62 = scmp.ne.s32.totalorder %s57, %s59
    %p63 = scmp.eq.s32.totalorder %s9, 0
    %p64 = por %p62, %p63
    %p65 = scmp.ne.s32.totalorder %s57, %s59
    %p66 = scmp.eq.s32.totalorder %s14, 1
    %p67 = por %p65, %p66
    %p68 = scmp.ne.s32.totalorder %s59, %s60
    %p69 = scmp.eq.s32.totalorder %s14, 0
    %p70 = por %p68, %p69
    %p71 = scmp.ne.s32.totalorder %s59, %s60
    %p72 = scmp.eq.s32.totalorder %s15, 1
    %p73 = por %p71, %p72
    %p75 = scmp.ne.s32.totalorder %s60, %s74
    %p76 = scmp.eq.s32.totalorder %s15, 0
    %p77 = por %p75, %p76
    %s79 = sadd.s32 %s78, 1
    %p82 = scmp.eq.s32.totalorder %s9, 1
    %p83 = scmp.ne.s32.totalorder %s78, %s80
    %p84 = scmp.eq.s32.totalorder %s9, 0
    %p85 = por %p83, %p84
    %p86 = scmp.ne.s32.totalorder %s78, %s80
    %p87 = scmp.eq.s32.totalorder %s14, 1
    %p88 = por %p86, %p87
    %p89 = scmp.ne.s32.totalorder %s80, %s81
    %p90 = scmp.eq.s32.totalorder %s14, 0
    %p91 = por %p89, %p90
    %p92 = scmp.ne.s32.totalorder %s80, %s81
    %p93 = scmp.eq.s32.totalorder %s15, 1
    %p94 = por %p92, %p93
    %p96 = scmp.ne.s32.totalorder %s81, %s95
    %p97 = scmp.eq.s32.totalorder %s15, 0
    %p98 = por %p96, %p97
    %s99 = ssub.s32 %s16, %s28
    %s100 = ssub.s32 %s17, %s24
    %s101 = sor.u32 %s99, %s100
    %p102 = scmp.eq.s32.totalorder %s101, 0
    %s104 = sadd.s32 %s103, 1
    %s105 = scalar_select %p102, %s103, %s104
    %p108 = pneg %p102
    %p109 = scmp.eq.s32.totalorder %s9, 1
    %p110 = por %p108, %p109
    %p111 = scmp.ne.s32.totalorder %s103, %s106
    %p112 = scmp.eq.s32.totalorder %s9, 0
    %p113 = por %p111, %p112
    %p114 = scmp.ne.s32.totalorder %s103, %s106
    %p115 = scmp.eq.s32.totalorder %s14, 1
    %p116 = por %p114, %p115
    %p117 = scmp.ne.s32.totalorder %s106, %s107
    %p118 = scmp.eq.s32.totalorder %s14, 0
    %p119 = por %p117, %p118
    %p120 = scmp.ne.s32.totalorder %s106, %s107
    %p121 = scmp.eq.s32.totalorder %s15, 1
    %p122 = por %p120, %p121
    %p124 = scmp.ne.s32.totalorder %s107, %s123
    %p125 = scmp.eq.s32.totalorder %s15, 0
    %p126 = por %p124, %p125
    %p127 = scmp.le.s32.totalorder 1, %s9
    %p128 = scmp.lt.s32.totalorder %s9, 3
    %p129 = pnand %p127, %p128
    %p130 = pneg %p129
    // Predicated region
    $region9: #{conv_forward.1} parent=5 // pred_check
      _
    $region10: #{conv_forward.1} parent=5 // pred_check_branch
      %132 = sbr.rel (%p129) target = $region12
    $region11: #{conv_forward.1} parent=5 // pred_region
      %s133 = ssub.s32 %s9, 1
      // Predicated region
      $region13: #{conv_forward.1} parent=11 // pred_check
        %p134 = pneg %p70
      $region14: #{conv_forward.1} parent=11 // pred_check_branch
        %136 = sbr.rel (%p134) target = $region16
      $region15: #{conv_forward.1} parent=11 // pred_region
        _
      $region16: #{conv_forward.1} parent=11 // pred_fallthru
        _
      // Predicated region
      $region17: #{conv_forward.1} parent=11 // pred_check
        %p137 = pneg %p91
      $region18: #{conv_forward.1} parent=11 // pred_check_branch
        %139 = sbr.rel (%p137) target = $region20
      $region19: #{conv_forward.1} parent=11 // pred_region
        _
      $region20: #{conv_forward.1} parent=11 // pred_fallthru
        _
    $region12: #{conv_forward.1} parent=5 // pred_fallthru
      _
    %p140 = scmp.lt.s32.totalorder %s9, 2
    // Predicated region
    $region21: #{conv_forward.1} parent=5 // pred_check
      %p141 = pneg %p140
    $region22: #{conv_forward.1} parent=5 // pred_check_branch
      %143 = sbr.rel (%p141) target = $region24
    $region23: #{conv_forward.1} parent=5 // pred_region
      // Predicated region
      $region25: #{conv_forward.1} parent=23 // pred_check
        %p144 = pneg %p43
      $region26: #{conv_forward.1} parent=23 // pred_check_branch
        %146 = sbr.rel (%p144) target = $region28
      $region27: #{conv_forward.1} parent=23 // pred_region
        %s147 = smul.u32 2, %s17
        %p148 = scmp.lt.s32.totalorder %s16, 1
        %s149 = scalar_select %p148, %s16, 1
        %p150 = scmp.lt.s32.totalorder %s147, 1
        %s151 = scalar_select %p150, %s147, 1
        %s152 = smul.addr %s149, 10
        %s153 = sadd.s32 %s151, %s152
        %s154 = smul.addr %s153, 4
        %s155 = scalar_lea.vmem %s0, %s154
        %s156 = smul.u32 2, %s17
      $region28: #{conv_forward.1} parent=23 // pred_fallthru
        _
    $region24: #{conv_forward.1} parent=5 // pred_fallthru
      _
    %p157 = scmp.le.s32.totalorder 1, %s9
    %p158 = scmp.lt.s32.totalorder %s9, 3
    %p159 = pnand %p157, %p158
    %p160 = pneg %p159
    // Predicated region
    $region29: #{conv_forward.1} parent=5 // pred_check
      _
    $region30: #{conv_forward.1} parent=5 // pred_check_branch
      %162 = sbr.rel (%p159) target = $region32
    $region31: #{conv_forward.1} parent=5 // pred_region
      %s163 = ssub.s32 %s9, 1
      %s164 = smul.u32 2, %s19
      %p165 = scmp.lt.s32.totalorder %s18, 1
      %s166 = scalar_select %p165, %s18, 1
      %p167 = scmp.lt.s32.totalorder %s164, 1
      %s168 = scalar_select %p167, %s164, 1
      %s169 = smul.addr %s166, 10
      %s170 = sadd.s32 %s168, %s169
      %s171 = smul.addr %s170, 4
      %s172 = scalar_lea.vmem %s0, %s171
      %p173 = pneg %p49
      %p174 = pneg %p46
      %p175 = pneg %p70
      %p176 = pneg %p67
      %p177 = pneg %p91
      %p178 = pneg %p88
      %p179 = pneg %p119
      %p180 = pneg %p116
      %s181 = smul.u32 2, %s19
      %p182 = scmp.lt.s32.totalorder %s18, 1
      %s183 = scalar_select %p182, %s18, 1
      %p184 = scmp.lt.s32.totalorder %s181, 1
      %s185 = scalar_select %p184, %s181, 1
      %s186 = smul.addr %s183, 2
      %s187 = sadd.s32 %s185, %s186
      %s188 = smul.addr %s187, 8
      %s189 = scalar_lea.vmem %s3, %s188
      %s190 = smul.u32 2, %s19
      %p191 = scmp.lt.s32.totalorder %s18, 1
      %s192 = scalar_select %p191, %s18, 1
      %p193 = scmp.lt.s32.totalorder %s190, 1
      %s194 = scalar_select %p193, %s190, 1
      %s195 = smul.addr %s192, 10
      %s196 = sadd.s32 %s194, %s195
      %s197 = smul.addr %s196, 4
      %s198 = scalar_lea.vmem %s0, %s197
      %s199 = smul.u32 2, %s19
      %s200 = smul.u32 2, %s19
      %p201 = scmp.lt.s32.totalorder %s18, 1
      %s202 = scalar_select %p201, %s18, 1
      %p203 = scmp.lt.s32.totalorder %s200, 1
      %s204 = scalar_select %p203, %s200, 1
      %s205 = smul.addr %s202, 2
      %s206 = sadd.s32 %s204, %s205
      %s207 = smul.addr %s206, 8
      %s208 = scalar_lea.vmem %s3, %s207
      %s209 = smul.u32 2, %s19
      %v211 = vld [vmem:[%s1] sm:$0xf]
      %v212 = vld [vmem:[%s198] sm:$0xff]
      %v213 = vld [vmem:[%s198 + $0x8] sm:$0xff]
      %v214 = vld [vmem:[%s198 + $0x10] sm:$0xff]
      %v215 = vld [vmem:[%s198 + $0x18] sm:$0xff]
      %v216 = vld [vmem:[%s198 + $0x20] sm:$0x33]
      %v217 = vld [vmem:[%s2] sm:$0xff]
      %219 = vset.pattern.permute.xlu0 0
      %220 = vperm.xlu0 %219, %v217
      %v221 = vpop.permute.xlu0 %220
      %v228 = vunpack.c.l.b16 %v212
      %v229 = vunpack.c.h.b16 %v212
      %v230 = vunpack.c.l.b16 %v213
      %v231 = vunpack.c.h.b16 %v213
      %v232 = vunpack.c.l.b16 %v214
      %v233 = vunpack.c.h.b16 %v214
      %v234 = vunpack.c.l.b16 %v215
      %v235 = vunpack.c.h.b16 %v215
      %v236 = vunpack.c.l.b16 %v216
      %v237 = vunpack.c.h.b16 %v216
      %v238 = vpack.c.b16 %v230, %v228
      %v239 = vpack.c.b16 %v231, %v229
      %v240 = vpack.c.b16 %v234, %v232
      %v241 = vpack.c.b16 %v235, %v233
      %v242 = vpack.c.b16 %v236, %v236
      %v243 = vpack.c.b16 %v237, %v237
      %vm248 = vcmask 293888
      %v250 = vsel %vm248, %v211, 0
      %vm252 = vcmask 1041408
      %v254 = vsel %vm252, %v242, 0
      %v257 = vsel %vm252, %v243, 0
      %259 = vmatprep.subr.bf16.mxu0 %v239
      %260 = vmatpush1.bf16.msra.mxu0 %v238
      %261 = vmatprep.subr.bf16.mxu0 %v241
      %262 = vmatpush1.bf16.msra.mxu0 %v240
      %263 = vmatprep.subr.bf16.mxu0 %v257
      %264 = vmatpush1.bf16.msra.mxu0 %v254
      %265 = vmatprep.subr.bf16.mxu0 0
      %266 = vmatpush1.bf16.msra.mxu0 0
      %267 = vmatprep.subr.bf16.mxu0 0
      %268 = vmatpush1.bf16.msra.mxu0 0
      %269 = vmatprep.subr.bf16.mxu0 0
      %270 = vmatpush1.bf16.msra.mxu0 0
      %271 = vmatprep.subr.bf16.mxu0 0
      %272 = vmatpush1.bf16.msra.mxu0 0
      %273 = vmatprep.subr.bf16.mxu0 0
      %274 = vmatpush1.bf16.msra.mxu0 0
      %275 = vmatprep.subr.bf16.mxu0 0
      %276 = vmatpush1.bf16.msra.mxu0 0
      %277 = vmatprep.subr.bf16.mxu0 0
      %278 = vmatpush1.bf16.msra.mxu0 0
      %279 = vmatprep.subr.bf16.mxu0 0
      %280 = vmatpush1.bf16.msra.mxu0 0
      %281 = vmatprep.subr.bf16.mxu0 0
      %282 = vmatpush1.bf16.msra.mxu0 0
      %283 = vmatprep.subr.bf16.mxu0 0
      %284 = vmatpush1.bf16.msra.mxu0 0
      %285 = vmatprep.subr.bf16.mxu0 0
      %286 = vmatpush1.bf16.msra.mxu0 0
      %287 = vmatprep.subr.bf16.mxu0 0
      %288 = vmatpush1.bf16.msra.mxu0 0
      %289 = vmatprep.subr.bf16.mxu0 0
      %290 = vmatpush1.bf16.msra.mxu0 0
      %291 = vmatprep.mubr.bf16.mxu0 0
      %292 = vmatmul.mubr.bf16.gmra.mrb[0].mxu0 %v250
      %v293 = vpop.f32.mrb[0].mxu0
      %v294 = vadd.f32 %v221, %v293
      %v295 = vpop.f32.mrb[0].mxu0
      %v296 = vadd.f32 %v221, %v295
      %v297 = vpop.f32.mrb[0].mxu0
      %v298 = vpop.f32.mrb[0].mxu0
      %299 = vdwg.mxu0
      %v300 = vmax.f32 %v294, 0.0
      %v301 = vmax.f32 %v296, 0.0
      %302 = vst [vmem:[%s208] sm:$0xff] %v300
      %303 = vst [vmem:[%s208 + $0x8] sm:$0xff] %v301
      %s304 = smul.u32 2, %s19
      %p305 = scmp.lt.s32.totalorder %s18, 1
      %s306 = scalar_select %p305, %s18, 1
      %p307 = scmp.lt.s32.totalorder %s304, 1
      %s308 = scalar_select %p307, %s304, 1
      %s309 = smul.addr %s306, 2
      %s310 = sadd.s32 %s308, %s309
      %s311 = smul.addr %s310, 8
      %s312 = scalar_lea.vmem %s3, %s311
      // Predicated region
      $region33: #{conv_forward.1} parent=31 // pred_check
        %p313 = pneg %p116
      $region34: #{conv_forward.1} parent=31 // pred_check_branch
        %315 = sbr.rel (%p313) target = $region36
      $region35: #{conv_forward.1} parent=31 // pred_region
        %s316 = smul.u32 2, %s19
      $region36: #{conv_forward.1} parent=31 // pred_fallthru
        _
    $region32: #{conv_forward.1} parent=5 // pred_fallthru
      _
    %p317 = scmp.le.s32.totalorder 2, %s9
    // Predicated region
    $region37: #{conv_forward.1} parent=5 // pred_check
      %p318 = pneg %p317
    $region38: #{conv_forward.1} parent=5 // pred_check_branch
      %320 = sbr.rel (%p318) target = $region40
    $region39: #{conv_forward.1} parent=5 // pred_region
      %s321 = ssub.s32 %s9, 2
      // Predicated region
      $region41: #{conv_forward.1} parent=39 // pred_check
        %p322 = pneg %p122
      $region42: #{conv_forward.1} parent=39 // pred_check_branch
        %324 = sbr.rel (%p322) target = $region44
      $region43: #{conv_forward.1} parent=39 // pred_region
        %s325 = smul.u32 2, %s21
        %p326 = scmp.lt.s32.totalorder %s20, 1
        %s327 = scalar_select %p326, %s20, 1
        %p328 = scmp.lt.s32.totalorder %s325, 1
        %s329 = scalar_select %p328, %s325, 1
        %s330 = smul.addr %s327, 2
        %s331 = sadd.s32 %s329, %s330
        %s332 = smul.addr %s331, 8
        %s333 = scalar_lea.vmem %s3, %s332
      $region44: #{conv_forward.1} parent=39 // pred_fallthru
        _
    $region40: #{conv_forward.1} parent=5 // pred_fallthru
      _
  $region6: #{conv_forward.1} parent=0 // loop_footer
    %s13 = sadd.s32 1, %s9
  $region7: #{conv_forward.1} parent=0 // loop_footer_branch
    %8 = sbr.rel target = $region3
  $region8: #{conv_forward.1} parent=0 // loop_exit
    _

</llo_original>
